<compile_context>
chip_gen: v5e
topology: v5e:2x2
jax: 0.10.0
libtpu: 0.0.40
codegen_flags: <defaults>
</compile_context>

<pallas_src>
import math

import jax
import jax.numpy as jnp
import numpy as np
from jax import lax
from jax.experimental import pallas as pl
from jax.experimental.pallas import tpu as pltpu


def _linear_vae_kernel(x_ref, wenc_ref, benc_ref, wdec_ref, bdec_ref,
                       sigp_ref, taup_ref, eps_ref, epssum_ref, out_ref):
    N, D = x_ref.shape
    H = taup_ref.shape[1]
    S = eps_ref.shape[0] // N
    f32 = jnp.float32
    log2pi = f32(math.log(2.0 * math.pi))

    x = x_ref[...]              # (N, D)
    w_enc = wenc_ref[...]       # (H, D)
    w_dec = wdec_ref[...]       # (D, H)

    # softplus / log of the std-dev parameters: computed exactly once.
    sigma = jax.nn.softplus(sigp_ref[...])      # (1, 1)
    tau = jax.nn.softplus(taup_ref[...])        # (1, H)
    log_sigma = jnp.log(sigma)                  # (1, 1)
    inv_sig2 = 1.0 / (sigma * sigma)            # (1, 1)

    # Contract last dims of both operands:  A @ B^T  (weights passed untransposed).
    dn_t = (((1,), (1,)), ((), ()))

    # --- encoder (once): z_enc = x @ W_enc^T + b_enc -------------------------
    zenc = lax.dot_general(x, w_enc, dn_t,
                           preferred_element_type=jnp.float32) + benc_ref[...]   # (N, H)

    # --- ONE merged decoder matmul (shared RHS w_dec) ------------------------
    #   rows 0..N-1      : z_enc                -> sample-invariant mean part
    #   rows N..2N-1     : tau * sum_s eps_s    -> cross-term  sum_s delta_s
    #   rows 2N..(S+2)N-1: tau * eps (all S)    -> per-sample noise delta
    lhs = jnp.concatenate(
        [zenc, tau * epssum_ref[...], tau * eps_ref[...]], axis=0)    # ((S+2)*N, H)
    dec = lax.dot_general(lhs, w_dec, dn_t,
                          preferred_element_type=jnp.float32)         # ((S+2)*N, D)

    mean0 = dec[:N, :] + bdec_ref[...]          # (N, D)
    delta_bar = dec[N:2 * N, :]                 # (N, D)  = sum_s delta_s
    delta = dec[2 * N:, :]                      # (S*N, D)

    diff0 = x - mean0                           # (N, D)
    # sum_s ||x - mean_s||^2 = S*||diff0||^2 - 2*<diff0, delta_bar> + ||delta||_F^2
    ss = (jnp.sum(diff0 * (f32(S) * diff0 - 2.0 * delta_bar))
          + jnp.sum(delta * delta))

    # --- batched tau reductions: one cross-lane pass for [log tau ; tau^2] ---
    tau_stats = jnp.concatenate([jnp.log(tau), tau * tau], axis=0)    # (2, H)
    tau_red = jnp.sum(tau_stats, axis=1, keepdims=True)               # (2, 1)
    sum_log_tau = tau_red[0:1, :]                                     # (1, 1)
    sum_tau2 = tau_red[1:2, :]                                        # (1, 1)

    # --- KL(q(z|x) || N(0, I)), closed form, summed over (N, H) --------------
    kl_sum = (f32(N) * (-sum_log_tau + 0.5 * sum_tau2 - 0.5 * f32(H))
              + 0.5 * jnp.sum(zenc * zenc))                           # (1, 1)

    # --- ELBO: mean over samples of sum log p(x|z)  minus  KL ----------------
    const_lp = f32(N * D) * (log_sigma + 0.5 * log2pi)                # (1, 1)
    mean_lp = (-0.5 / f32(S)) * ss * inv_sig2 - const_lp              # (1, 1)
    elbo = mean_lp - kl_sum                                           # (1, 1)

    # --- three entropies (linear VAE, Eq. 33) --------------------------------
    ent = f32(N) * (f32(-D) * 0.5 * (log2pi + 1.0)
                    - f32(D) * log_sigma + sum_log_tau)               # (1, 1)

    # --- single lane-dense output: lane 0 = elbo, lane 1 = entropies ---------
    lane = lax.broadcasted_iota(jnp.int32, out_ref.shape, 1)
    out_ref[...] = jnp.where(lane == 0, elbo,
                             jnp.where(lane == 1, ent, f32(0.0)))


@jax.jit
def linear_vae_forward(x, w_enc, b_enc, w_dec, b_dec, sigma_param, tau_param, eps):
    """Pallas implementation of LinearVAE.forward.

    x: (N, D), w_enc: (H, D), b_enc: (H,), w_dec: (D, H), b_dec: (D,),
    sigma_param: (1,), tau_param: (H,), eps: (S, N, H) pre-drawn N(0,1) noise
    (replaces q_z.rsample's internal randomness).
    Returns (elbo, three_entropies_linear), both float32 scalars.
    """
    N, D = x.shape
    H = w_enc.shape[0]
    S = eps.shape[0]

    x = jnp.asarray(x, jnp.float32)
    w_enc = jnp.asarray(w_enc, jnp.float32)                 # (H, D) — no transpose
    b_enc = jnp.asarray(b_enc, jnp.float32).reshape(1, H)
    w_dec = jnp.asarray(w_dec, jnp.float32)                 # (D, H) — no transpose
    b_dec = jnp.asarray(b_dec, jnp.float32).reshape(1, D)
    sigp = jnp.asarray(sigma_param, jnp.float32).reshape(1, 1)
    taup = jnp.asarray(tau_param, jnp.float32).reshape(1, H)
    eps = jnp.asarray(eps, jnp.float32)
    eps2d = eps.reshape(S * N, H)                           # fold S into the M dim
    eps_sum = jnp.sum(eps, axis=0)                          # (N, H), pre-reduced over S

    vmem = lambda: pl.BlockSpec(memory_space=pltpu.MemorySpace.VMEM)

    out = pl.pallas_call(
        _linear_vae_kernel,
        out_shape=jax.ShapeDtypeStruct((8, 128), jnp.float32),
        in_specs=[vmem() for _ in range(9)],
        out_specs=vmem(),
    )(x, w_enc, b_enc, w_dec, b_dec, sigp, taup, eps2d, eps_sum)

    return out[0, 0], out[0, 1]


def linear_vae_reference(x, w_enc, b_enc, w_dec, b_dec, sigma_param, tau_param, eps):
    """Pure-JAX reference mirroring the PyTorch forward (same eps)."""
    sigma = jax.nn.softplus(sigma_param)          # (1,)
    tau = jax.nn.softplus(tau_param)              # (H,)
    z_enc = x @ w_enc.T + b_enc                   # (N, H)
    z = z_enc[None, :, :] + tau * eps             # (S, N, H)
    mean = z @ w_dec.T + b_dec                    # (S, N, D)
    lp = (-0.5 * (x - mean) ** 2 / sigma ** 2
          - jnp.log(sigma) - 0.5 * jnp.log(2.0 * jnp.pi))
    kl = -jnp.log(tau) + 0.5 * (tau ** 2 + z_enc ** 2) - 0.5
    elbo = lp.mean(0).sum() - kl.sum()
    N, D = x.shape
    ent = N * (-D / 2.0 * (jnp.log(2.0 * jnp.pi) + 1.0)
               - D * jnp.log(sigma[0]) + jnp.log(tau).sum())
    return elbo, ent


if __name__ == "__main__":
    # Small shapes: batch N=8, data dim D=32, latent H=16, MC samples S=8.
    # (N multiple of 8 keeps all sublane slices (8,128)-tile aligned.)
    N, D, H, S = 8, 32, 16, 8

    key = jax.random.PRNGKey(0)
    kx, kwe, kbe, kwd, kbd, keps = jax.random.split(key, 6)

    x = jax.random.normal(kx, (N, D), dtype=jnp.float32)

    # Deterministic parameter init (shapes from LinearVAE.__init__):
    # Linear(D, H): weight (H, D), bias (H,); Linear(H, D): weight (D, H), bias (D,)
    bound_e = 1.0 / math.sqrt(D)
    bound_d = 1.0 / math.sqrt(H)
    w_enc = jax.random.uniform(kwe, (H, D), jnp.float32, -bound_e, bound_e)
    b_enc = jax.random.uniform(kbe, (H,), jnp.float32, -bound_e, bound_e)
    w_dec = jax.random.uniform(kwd, (D, H), jnp.float32, -bound_d, bound_d)
    b_dec = jax.random.uniform(kbd, (D,), jnp.float32, -bound_d, bound_d)
    sigma_param = jnp.zeros((1,), jnp.float32)
    tau_param = jnp.zeros((H,), jnp.float32)

    # Reparameterization noise (replaces torch's q_z.rsample RNG).
    eps = jax.random.normal(keps, (S, N, H), dtype=jnp.float32)

    elbo, ent = linear_vae_forward(x, w_enc, b_enc, w_dec, b_dec,
                                   sigma_param, tau_param, eps)
    elbo = jax.block_until_ready(elbo)
    ent = jax.block_until_ready(ent)

    elbo_ref, ent_ref = linear_vae_reference(x, w_enc, b_enc, w_dec, b_dec,
                                             sigma_param, tau_param, eps)
    np.testing.assert_allclose(np.asarray(elbo), np.asarray(elbo_ref),
                               rtol=1e-4, atol=1e-3)
    np.testing.assert_allclose(np.asarray(ent), np.asarray(ent_ref),
                               rtol=1e-4, atol=1e-3)

    print("KERNEL_OK")
</pallas_src>

<mosaic_0001>
module attributes {stable_mosaic.version = 11 : i64} {
  func.func @_linear_vae_kernel(%arg0: memref<8x32xf32, #tpu.memory_space<vmem>>, %arg1: memref<16x32xf32, #tpu.memory_space<vmem>>, %arg2: memref<1x16xf32, #tpu.memory_space<vmem>>, %arg3: memref<32x16xf32, #tpu.memory_space<vmem>>, %arg4: memref<1x32xf32, #tpu.memory_space<vmem>>, %arg5: memref<1x1xf32, #tpu.memory_space<vmem>>, %arg6: memref<1x16xf32, #tpu.memory_space<vmem>>, %arg7: memref<64x16xf32, #tpu.memory_space<vmem>>, %arg8: memref<8x16xf32, #tpu.memory_space<vmem>>, %arg9: memref<8x128xf32, #tpu.memory_space<vmem>>) attributes {dimension_semantics = [], scalar_prefetch = 0 : i64, scratch_operands = 0 : i64, tpu.core_type = #tpu.core_type<tc>} {
    %c0 = arith.constant 0 : index
    %c0_0 = arith.constant 0 : index
    %0 = vector.load %arg0[%c0, %c0_0] : memref<8x32xf32, #tpu.memory_space<vmem>>, vector<8x32xf32>
    %c0_1 = arith.constant 0 : index
    %c0_2 = arith.constant 0 : index
    %1 = vector.load %arg1[%c0_1, %c0_2] : memref<16x32xf32, #tpu.memory_space<vmem>>, vector<16x32xf32>
    %c0_3 = arith.constant 0 : index
    %c0_4 = arith.constant 0 : index
    %2 = vector.load %arg3[%c0_3, %c0_4] : memref<32x16xf32, #tpu.memory_space<vmem>>, vector<32x16xf32>
    %c0_5 = arith.constant 0 : index
    %c0_6 = arith.constant 0 : index
    %3 = vector.load %arg5[%c0_5, %c0_6] : memref<1x1xf32, #tpu.memory_space<vmem>>, vector<1x1xf32>
    %cst = arith.constant 0.000000e+00 : f32
    %4 = vector.broadcast %cst : f32 to vector<1x1xf32>
    %5 = arith.maximumf %3, %4 : vector<1x1xf32>
    %6 = vector.broadcast %cst : f32 to vector<1x1xf32>
    %7 = arith.subf %3, %6 : vector<1x1xf32>
    %8 = arith.cmpf one, %7, %7 : vector<1x1xf32>
    %9 = vector.broadcast %cst : f32 to vector<1x1xf32>
    %10 = arith.addf %3, %9 : vector<1x1xf32>
    %11 = math.absf %7 : vector<1x1xf32>
    %cst_7 = arith.constant 0.000000e+00 : f32
    %12 = vector.broadcast %cst_7 : f32 to vector<1x1xf32>
    %13 = arith.subf %12, %11 : vector<1x1xf32>
    %14 = math.exp %13 : vector<1x1xf32>
    %15 = math.log1p %14 : vector<1x1xf32>
    %16 = arith.addf %5, %15 : vector<1x1xf32>
    %17 = arith.select %8, %10, %16 : vector<1x1xi1>, vector<1x1xf32>
    %c0_8 = arith.constant 0 : index
    %c0_9 = arith.constant 0 : index
    %18 = vector.load %arg6[%c0_8, %c0_9] : memref<1x16xf32, #tpu.memory_space<vmem>>, vector<1x16xf32>
    %cst_10 = arith.constant 0.000000e+00 : f32
    %19 = vector.broadcast %cst_10 : f32 to vector<1x16xf32>
    %20 = arith.maximumf %18, %19 : vector<1x16xf32>
    %21 = vector.broadcast %cst_10 : f32 to vector<1x16xf32>
    %22 = arith.subf %18, %21 : vector<1x16xf32>
    %23 = arith.cmpf one, %22, %22 : vector<1x16xf32>
    %24 = vector.broadcast %cst_10 : f32 to vector<1x16xf32>
    %25 = arith.addf %18, %24 : vector<1x16xf32>
    %26 = math.absf %22 : vector<1x16xf32>
    %cst_11 = arith.constant 0.000000e+00 : f32
    %27 = vector.broadcast %cst_11 : f32 to vector<1x16xf32>
    %28 = arith.subf %27, %26 : vector<1x16xf32>
    %29 = math.exp %28 : vector<1x16xf32>
    %30 = math.log1p %29 : vector<1x16xf32>
    %31 = arith.addf %20, %30 : vector<1x16xf32>
    %32 = arith.select %23, %25, %31 : vector<1x16xi1>, vector<1x16xf32>
    %33 = math.log %17 : vector<1x1xf32>
    %34 = arith.mulf %17, %17 : vector<1x1xf32>
    %cst_12 = arith.constant 1.000000e+00 : f32
    %35 = vector.broadcast %cst_12 : f32 to vector<1x1xf32>
    %36 = arith.divf %35, %34 : vector<1x1xf32>
    %cst_13 = arith.constant dense<0.000000e+00> : vector<8x16xf32>
    %37 = tpu.matmul %0, %1, %cst_13 {dimension_numbers = #tpu.dot_dimension_numbers<[1], [1], [0], [0], [0, 0, 1, 0], [], []>} : vector<8x32xf32>, vector<16x32xf32>, vector<8x16xf32> -> vector<8x16xf32>
    %c0_14 = arith.constant 0 : index
    %c0_15 = arith.constant 0 : index
    %38 = vector.load %arg2[%c0_14, %c0_15] : memref<1x16xf32, #tpu.memory_space<vmem>>, vector<1x16xf32>
    %39 = vector.broadcast %38 : vector<1x16xf32> to vector<8x16xf32>
    %40 = arith.addf %37, %39 : vector<8x16xf32>
    %c0_16 = arith.constant 0 : index
    %c0_17 = arith.constant 0 : index
    %41 = vector.load %arg8[%c0_16, %c0_17] : memref<8x16xf32, #tpu.memory_space<vmem>>, vector<8x16xf32>
    %42 = vector.broadcast %32 : vector<1x16xf32> to vector<8x16xf32>
    %43 = arith.mulf %42, %41 : vector<8x16xf32>
    %c0_18 = arith.constant 0 : index
    %c0_19 = arith.constant 0 : index
    %44 = vector.load %arg7[%c0_18, %c0_19] : memref<64x16xf32, #tpu.memory_space<vmem>>, vector<64x16xf32>
    %45 = vector.broadcast %32 : vector<1x16xf32> to vector<64x16xf32>
    %46 = arith.mulf %45, %44 : vector<64x16xf32>
    %47 = tpu.concatenate %40, %43, %46 in 0 : vector<8x16xf32>, vector<8x16xf32>, vector<64x16xf32> -> vector<80x16xf32>
    %cst_20 = arith.constant dense<0.000000e+00> : vector<80x32xf32>
    %48 = tpu.matmul %47, %2, %cst_20 {dimension_numbers = #tpu.dot_dimension_numbers<[1], [1], [0], [0], [0, 0, 1, 0], [], []>} : vector<80x16xf32>, vector<32x16xf32>, vector<80x32xf32> -> vector<80x32xf32>
    %49 = vector.extract_strided_slice %48 {offsets = [0, 0], sizes = [8, 32], strides = [1, 1]} : vector<80x32xf32> to vector<8x32xf32>
    %c0_21 = arith.constant 0 : index
    %c0_22 = arith.constant 0 : index
    %50 = vector.load %arg4[%c0_21, %c0_22] : memref<1x32xf32, #tpu.memory_space<vmem>>, vector<1x32xf32>
    %51 = vector.broadcast %50 : vector<1x32xf32> to vector<8x32xf32>
    %52 = arith.addf %49, %51 : vector<8x32xf32>
    %53 = vector.extract_strided_slice %48 {offsets = [8, 0], sizes = [8, 32], strides = [1, 1]} : vector<80x32xf32> to vector<8x32xf32>
    %54 = vector.extract_strided_slice %48 {offsets = [16, 0], sizes = [64, 32], strides = [1, 1]} : vector<80x32xf32> to vector<64x32xf32>
    %55 = arith.subf %0, %52 : vector<8x32xf32>
    %cst_23 = arith.constant 8.000000e+00 : f32
    %56 = vector.broadcast %cst_23 : f32 to vector<8x32xf32>
    %57 = arith.mulf %56, %55 : vector<8x32xf32>
    %cst_24 = arith.constant 2.000000e+00 : f32
    %58 = vector.broadcast %cst_24 : f32 to vector<8x32xf32>
    %59 = arith.mulf %58, %53 : vector<8x32xf32>
    %60 = arith.subf %57, %59 : vector<8x32xf32>
    %61 = arith.mulf %55, %60 : vector<8x32xf32>
    %62 = vector.shape_cast %61 : vector<8x32xf32> to vector<1x8x32xf32>
    %cst_25 = arith.constant dense<0.000000e+00> : vector<1xf32>
    %63 = vector.multi_reduction <add>, %62, %cst_25 [1, 2] : vector<1x8x32xf32> to vector<1xf32>
    %64 = vector.shape_cast %63 : vector<1xf32> to vector<1x1x1xf32>
    %65 = vector.extract %64[0, 0, 0] : f32 from vector<1x1x1xf32>
    %66 = arith.mulf %54, %54 : vector<64x32xf32>
    %67 = vector.shape_cast %66 : vector<64x32xf32> to vector<1x64x32xf32>
    %cst_26 = arith.constant dense<0.000000e+00> : vector<1xf32>
    %68 = vector.multi_reduction <add>, %67, %cst_26 [1, 2] : vector<1x64x32xf32> to vector<1xf32>
    %69 = vector.shape_cast %68 : vector<1xf32> to vector<1x1x1xf32>
    %70 = vector.extract %69[0, 0, 0] : f32 from vector<1x1x1xf32>
    %71 = arith.addf %65, %70 : f32
    %72 = math.log %32 : vector<1x16xf32>
    %73 = arith.mulf %32, %32 : vector<1x16xf32>
    %74 = tpu.concatenate %72, %73 in 0 : vector<1x16xf32>, vector<1x16xf32> -> vector<2x16xf32>
    %cst_27 = arith.constant dense<0.000000e+00> : vector<2xf32>
    %75 = vector.multi_reduction <add>, %74, %cst_27 [1] : vector<2x16xf32> to vector<2xf32>
    %76 = vector.shape_cast %75 : vector<2xf32> to vector<2x1xf32>
    %77 = vector.extract_strided_slice %76 {offsets = [0, 0], sizes = [1, 1], strides = [1, 1]} : vector<2x1xf32> to vector<1x1xf32>
    %78 = vector.extract_strided_slice %76 {offsets = [1, 0], sizes = [1, 1], strides = [1, 1]} : vector<2x1xf32> to vector<1x1xf32>
    %cst_28 = arith.constant 0.000000e+00 : f32
    %79 = vector.broadcast %cst_28 : f32 to vector<1x1xf32>
    %80 = arith.subf %79, %77 : vector<1x1xf32>
    %cst_29 = arith.constant 5.000000e-01 : f32
    %81 = vector.broadcast %cst_29 : f32 to vector<1x1xf32>
    %82 = arith.mulf %81, %78 : vector<1x1xf32>
    %83 = arith.addf %80, %82 : vector<1x1xf32>
    %cst_30 = arith.constant 5.000000e-01 : f32
    %cst_31 = arith.constant 1.600000e+01 : f32
    %84 = arith.mulf %cst_30, %cst_31 : f32
    %85 = vector.broadcast %84 : f32 to vector<1x1xf32>
    %86 = arith.subf %83, %85 : vector<1x1xf32>
    %cst_32 = arith.constant 8.000000e+00 : f32
    %87 = vector.broadcast %cst_32 : f32 to vector<1x1xf32>
    %88 = arith.mulf %87, %86 : vector<1x1xf32>
    %89 = arith.mulf %40, %40 : vector<8x16xf32>
    %90 = vector.shape_cast %89 : vector<8x16xf32> to vector<1x8x16xf32>
    %cst_33 = arith.constant dense<0.000000e+00> : vector<1xf32>
    %91 = vector.multi_reduction <add>, %90, %cst_33 [1, 2] : vector<1x8x16xf32> to vector<1xf32>
    %92 = vector.shape_cast %91 : vector<1xf32> to vector<1x1x1xf32>
    %93 = vector.extract %92[0, 0, 0] : f32 from vector<1x1x1xf32>
    %cst_34 = arith.constant 5.000000e-01 : f32
    %94 = arith.mulf %cst_34, %93 : f32
    %95 = vector.broadcast %94 : f32 to vector<1x1xf32>
    %96 = arith.addf %88, %95 : vector<1x1xf32>
    %cst_35 = arith.constant 5.000000e-01 : f32
    %cst_36 = arith.constant 1.83787704 : f32
    %97 = arith.mulf %cst_35, %cst_36 : f32
    %98 = vector.broadcast %97 : f32 to vector<1x1xf32>
    %99 = arith.addf %33, %98 : vector<1x1xf32>
    %cst_37 = arith.constant 2.560000e+02 : f32
    %100 = vector.broadcast %cst_37 : f32 to vector<1x1xf32>
    %101 = arith.mulf %100, %99 : vector<1x1xf32>
    %cst_38 = arith.constant -5.000000e-01 : f32
    %cst_39 = arith.constant 8.000000e+00 : f32
    %102 = arith.divf %cst_38, %cst_39 : f32
    %103 = arith.mulf %102, %71 : f32
    %104 = vector.broadcast %103 : f32 to vector<1x1xf32>
    %105 = arith.mulf %104, %36 : vector<1x1xf32>
    %106 = arith.subf %105, %101 : vector<1x1xf32>
    %107 = arith.subf %106, %96 : vector<1x1xf32>
    %cst_40 = arith.constant -3.200000e+01 : f32
    %cst_41 = arith.constant 5.000000e-01 : f32
    %108 = arith.mulf %cst_40, %cst_41 : f32
    %cst_42 = arith.constant 1.83787704 : f32
    %cst_43 = arith.constant 1.000000e+00 : f32
    %109 = arith.addf %cst_42, %cst_43 : f32
    %110 = arith.mulf %108, %109 : f32
    %cst_44 = arith.constant 3.200000e+01 : f32
    %111 = vector.broadcast %cst_44 : f32 to vector<1x1xf32>
    %112 = arith.mulf %111, %33 : vector<1x1xf32>
    %113 = vector.broadcast %110 : f32 to vector<1x1xf32>
    %114 = arith.subf %113, %112 : vector<1x1xf32>
    %115 = arith.addf %114, %77 : vector<1x1xf32>
    %cst_45 = arith.constant 8.000000e+00 : f32
    %116 = vector.broadcast %cst_45 : f32 to vector<1x1xf32>
    %117 = arith.mulf %116, %115 : vector<1x1xf32>
    %118 = tpu.iota {dimensions = array<i32: 1>} : vector<8x128xi32>
    %c0_i32 = arith.constant 0 : i32
    %119 = vector.broadcast %c0_i32 : i32 to vector<8x128xi32>
    %120 = arith.cmpi eq, %118, %119 : vector<8x128xi32>
    %c1_i32 = arith.constant 1 : i32
    %121 = vector.broadcast %c1_i32 : i32 to vector<8x128xi32>
    %122 = arith.cmpi eq, %118, %121 : vector<8x128xi32>
    %cst_46 = arith.constant 0.000000e+00 : f32
    %123 = vector.shape_cast %117 : vector<1x1xf32> to vector<1x1xf32>
    %124 = vector.broadcast %123 : vector<1x1xf32> to vector<8x128xf32>
    %125 = vector.broadcast %cst_46 : f32 to vector<8x128xf32>
    %126 = arith.select %122, %124, %125 : vector<8x128xi1>, vector<8x128xf32>
    %127 = vector.shape_cast %107 : vector<1x1xf32> to vector<1x1xf32>
    %128 = vector.broadcast %127 : vector<1x1xf32> to vector<8x128xf32>
    %129 = arith.select %120, %128, %126 : vector<8x128xi1>, vector<8x128xf32>
    %c0_47 = arith.constant 0 : index
    %c0_48 = arith.constant 0 : index
    %130 = vector.load %arg9[%c0_47, %c0_48] : memref<8x128xf32, #tpu.memory_space<vmem>>, vector<8x128xf32>
    tpu.vector_store %arg9[%c0_47, %c0_48], %129 {strides = array<i32>} : memref<8x128xf32, #tpu.memory_space<vmem>>, vector<8x128xf32>,
    return
  }
}

</mosaic_0001>

<llo_original>
// kernel: linear_vae_forward.1
$region0: #{linear_vae_forward.1}
  #allocation0 [shape = 'u32[]', space=smem, size = 0x4, offset = 0x4, fixed_abs, tag = 'smem constant byte address 0x4 - core index']
  #allocation1 [shape = 'u32[72,128]{1,0:T(1,128)}', space=vmem, size = 0x9000, scoped, tag = 'internal scratch']
  #allocation2 [shape = 'f32[1,1]{1,0:T(1,128)S(1)}', space=vmem, size = 0x200, scoped, tag = 'scoped memory for linear_vae_forward.1']
  %s0 = inlined_call_operand.vmem [shape: f32[8,32], index: 0, kind: input, shape index: {}]
  %s1 = inlined_call_operand.vmem [shape: f32[16,32], index: 1, kind: input, shape index: {}]
  %s2 = inlined_call_operand.vmem [shape: f32[1,16], index: 2, kind: input, shape index: {}]
  %s3 = inlined_call_operand.vmem [shape: f32[32,16], index: 3, kind: input, shape index: {}]
  %s4 = inlined_call_operand.vmem [shape: f32[1,32], index: 4, kind: input, shape index: {}]
  %s5 = inlined_call_operand.<no memory space> [shape: f32[1,1], index: 5, kind: input, shape index: {}]
  %s6 = inlined_call_operand.vmem [shape: f32[1,16], index: 6, kind: input, shape index: {}]
  %s7 = inlined_call_operand.vmem [shape: f32[64,16], index: 7, kind: input, shape index: {}]
  %s8 = inlined_call_operand.vmem [shape: f32[8,16], index: 8, kind: input, shape index: {}]
  %s9 = inlined_call_operand.vmem [shape: f32[8,128], index: 9, kind: output, shape index: {}]
  %s10 = sld [smem:[#allocation0]]
  $region46: #{linear_vae_forward.1} parent=0
    _
  %s12 = ssub.s32 1, %s10
  %s13 = scalar_select 0, %s12, %s10
  %v14 = vstv %s5
  %15 = vst [vmem:[#allocation2] sm:$0x1] %v14
  // Predicated region
  $region2: #{linear_vae_forward.1} parent=0 // pred_check
    _
  $region3: #{linear_vae_forward.1} parent=0 // pred_check_branch
    %17 = sbr.rel (0) target = $region5
  $region4: #{linear_vae_forward.1} parent=0 // pred_region
    _
  $region5: #{linear_vae_forward.1} parent=0 // pred_fallthru
    _
  // Predicated region
  $region6: #{linear_vae_forward.1} parent=0 // pred_check
    _
  $region7: #{linear_vae_forward.1} parent=0 // pred_check_branch
    %19 = sbr.rel (0) target = $region9
  $region8: #{linear_vae_forward.1} parent=0 // pred_region
    _
  $region9: #{linear_vae_forward.1} parent=0 // pred_fallthru
    _
  // Predicated region
  $region10: #{linear_vae_forward.1} parent=0 // pred_check
    _
  $region11: #{linear_vae_forward.1} parent=0 // pred_check_branch
    %21 = sbr.rel (0) target = $region13
  $region12: #{linear_vae_forward.1} parent=0 // pred_region
    _
  $region13: #{linear_vae_forward.1} parent=0 // pred_fallthru
    _
  // Predicated region
  $region14: #{linear_vae_forward.1} parent=0 // pred_check
    _
  $region15: #{linear_vae_forward.1} parent=0 // pred_check_branch
    %23 = sbr.rel (0) target = $region17
  $region16: #{linear_vae_forward.1} parent=0 // pred_region
    _
  $region17: #{linear_vae_forward.1} parent=0 // pred_fallthru
    _
  // Predicated region
  $region18: #{linear_vae_forward.1} parent=0 // pred_check
    _
  $region19: #{linear_vae_forward.1} parent=0 // pred_check_branch
    %25 = sbr.rel (0) target = $region21
  $region20: #{linear_vae_forward.1} parent=0 // pred_region
    _
  $region21: #{linear_vae_forward.1} parent=0 // pred_fallthru
    _
  // Predicated region
  $region22: #{linear_vae_forward.1} parent=0 // pred_check
    _
  $region23: #{linear_vae_forward.1} parent=0 // pred_check_branch
    %27 = sbr.rel (0) target = $region25
  $region24: #{linear_vae_forward.1} parent=0 // pred_region
    _
  $region25: #{linear_vae_forward.1} parent=0 // pred_fallthru
    _
  // Predicated region
  $region26: #{linear_vae_forward.1} parent=0 // pred_check
    _
  $region27: #{linear_vae_forward.1} parent=0 // pred_check_branch
    %29 = sbr.rel (0) target = $region29
  $region28: #{linear_vae_forward.1} parent=0 // pred_region
    _
  $region29: #{linear_vae_forward.1} parent=0 // pred_fallthru
    _
  // Predicated region
  $region30: #{linear_vae_forward.1} parent=0 // pred_check
    _
  $region31: #{linear_vae_forward.1} parent=0 // pred_check_branch
    %31 = sbr.rel (0) target = $region33
  $region32: #{linear_vae_forward.1} parent=0 // pred_region
    _
  $region33: #{linear_vae_forward.1} parent=0 // pred_fallthru
    _
  // Predicated region
  $region34: #{linear_vae_forward.1} parent=0 // pred_check
    _
  $region35: #{linear_vae_forward.1} parent=0 // pred_check_branch
    %33 = sbr.rel (0) target = $region37
  $region36: #{linear_vae_forward.1} parent=0 // pred_region
    _
  $region37: #{linear_vae_forward.1} parent=0 // pred_fallthru
    _
  %v34 = vld [vmem:[%s0] sm:$0xff]
  %v35 = vld [vmem:[%s1] sm:$0xff]
  %v36 = vld [vmem:[%s1 + $0x8] sm:$0xff]
  %v37 = vld [vmem:[%s3] sm:$0xff]
  %v38 = vld [vmem:[%s3 + $0x8] sm:$0xff]
  %v39 = vld [vmem:[%s3 + $0x10] sm:$0xff]
  %v40 = vld [vmem:[%s3 + $0x18] sm:$0xff]
  %v41 = vld [vmem:[#allocation2] sm:$0x1]
  %v42 = vmax.f32 %v41, 0.0
  %vm43 = vcmp.ne.f32.partialorder %v41, %v41
  %v44 = vadd.f32 %v41, 0.0
  %v45 = vand.u32 2147483647, %v41
  %v46 = vsub.f32 0.0, %v45
  %v47 = vmul.f32 %v46, 1.442695
  %v48 = vpow.pop %v47
  %v49 = vadd.f32 %v48, 1.0
  %v50 = vlog2.pop %v49
  %v51 = vmul.f32 %v50, 0.6931472
  %v52 = vmul.f32 -0.5, %v48
  %v53 = vadd.f32 %v52, 1.0
  %v54 = vmul.f32 %v53, %v48
  %v55 = vand.u32 2147483647, %v48
  %vm56 = vcmp.lt.f32.partialorder %v55, 0.0004427343
  %v57 = vsel %vm56, %v54, %v51
  %v58 = vadd.f32 %v42, %v57
  %v59 = vsel %vm43, %v44, %v58
  %v60 = vld [vmem:[%s6] sm:$0x1]
  %v61 = vmax.f32 %v60, 0.0
  %vm62 = vcmp.ne.f32.partialorder %v60, %v60
  %v63 = vadd.f32 %v60, 0.0
  %v64 = vand.u32 2147483647, %v60
  %v65 = vsub.f32 0.0, %v64
  %v66 = vmul.f32 %v65, 1.442695
  %v67 = vpow.pop %v66
  %v68 = vadd.f32 %v67, 1.0
  %v69 = vlog2.pop %v68
  %v70 = vmul.f32 %v69, 0.6931472
  %v71 = vmul.f32 -0.5, %v67
  %v72 = vadd.f32 %v71, 1.0
  %v73 = vmul.f32 %v72, %v67
  %v74 = vand.u32 2147483647, %v67
  %vm75 = vcmp.lt.f32.partialorder %v74, 0.0004427343
  %v76 = vsel %vm75, %v73, %v70
  %v77 = vadd.f32 %v61, %v76
  %v78 = vsel %vm62, %v63, %v77
  %v79 = vlog2.pop %v59
  %v80 = vmul.f32 %v79, 0.6931472
  %v81 = vmul.f32 %v59, %v59
  %v82 = vrcp.pop %v81
  %v83 = vmul.f32 %v81, %v82
  %v84 = vsub.f32 1.0, %v83
  %v85 = vmul.f32 %v82, %v84
  %v86 = vadd.f32 %v82, %v85
  %vm87 = vweird.f32 %v81
  %vm88 = vweird.f32 %v82
  %vm89 = vmor %vm87, %vm88
  %v90 = vsel %vm89, %v82, %v86
  %v91 = vand.u32 2147483647, %v81
  %vm92 = vcmp.eq.f32.partialorder %v91, 8.507059e+37
  %v93 = vand.u32 %v81, 2147483648
  %v94 = vor.u32 1.1754944e-38, %v93
  %v95 = vsel %vm92, %v94, %v90
  %v96 = vmul.f32 1.0, %v95
  %v97 = vld [vmem:[%s2] sm:$0x1]
  %v99 = vperm.slane %v97, 0
  %vm101 = vcmask 261120
  %v103 = vsel %vm101, %v34, 0
  %v106 = vsel %vm101, %v35, 0
  %v109 = vsel %vm101, %v36, 0
  %111 = vmatpush.xpose.msra.mxu0 0.0
  %112 = vmatpush.xpose.msra.mxu0 0.0
  %113 = vmatpush.xpose.msra.mxu0 0.0
  %114 = vmatpush.xpose.msra.mxu0 0.0
  %115 = vmatpush.xpose.msra.mxu0 0.0
  %116 = vmatpush.xpose.msra.mxu0 0.0
  %117 = vmatpush.xpose.msra.mxu0 0.0
  %118 = vmatpush.xpose.msra.mxu0 0.0
  %119 = vmatpush.xpose.msra.mxu0 0.0
  %120 = vmatpush.xpose.msra.mxu0 0.0
  %121 = vmatpush.xpose.msra.mxu0 0.0
  %122 = vmatpush.xpose.msra.mxu0 0.0
  %123 = vmatpush.xpose.msra.mxu0 0.0
  %124 = vmatpush.xpose.msra.mxu0 0.0
  %125 = vmatpush.xpose.msra.mxu0 %v109
  %126 = vmatpush.xpose.msra.mxu0 %v106
  %127 = vmatmul.f32.gmra.mxu0 %v103
  %v128 = vpop.f32.mrf.mxu0
  %v129 = vadd.f32 %v99, %v128
  %130 = vdwg.mxu0
  %v131 = vld [vmem:[%s8] sm:$0xff]
  %v133 = vperm.slane %v78, 0
  %v135 = vmul.f32 %v133, %v131
  %v136 = vld [vmem:[%s7] sm:$0xff]
  %v137 = vld [vmem:[%s7 + $0x8] sm:$0xff]
  %v138 = vld [vmem:[%s7 + $0x10] sm:$0xff]
  %v139 = vld [vmem:[%s7 + $0x18] sm:$0xff]
  %v140 = vld [vmem:[%s7 + $0x20] sm:$0xff]
  %v141 = vld [vmem:[%s7 + $0x28] sm:$0xff]
  %v142 = vld [vmem:[%s7 + $0x30] sm:$0xff]
  %v143 = vld [vmem:[%s7 + $0x38] sm:$0xff]
  %v144 = vmul.f32 %v133, %v136
  %v145 = vmul.f32 %v133, %v137
  %v146 = vmul.f32 %v133, %v138
  %v147 = vmul.f32 %v133, %v139
  %v148 = vmul.f32 %v133, %v140
  %v149 = vmul.f32 %v133, %v141
  %v150 = vmul.f32 %v133, %v142
  %v151 = vmul.f32 %v133, %v143
  %vm152 = vcmask 130048
  %v154 = vsel %vm152, %v129, 0
  %v157 = vsel %vm152, %v135, 0
  %v160 = vsel %vm152, %v144, 0
  %v163 = vsel %vm152, %v145, 0
  %v166 = vsel %vm152, %v146, 0
  %v169 = vsel %vm152, %v147, 0
  %v172 = vsel %vm152, %v148, 0
  %v175 = vsel %vm152, %v149, 0
  %v178 = vsel %vm152, %v150, 0
  %v181 = vsel %vm152, %v151, 0
  %v184 = vsel %vm152, %v37, 0
  %v187 = vsel %vm152, %v38, 0
  %v190 = vsel %vm152, %v39, 0
  %v193 = vsel %vm152, %v40, 0
  %195 = vmatpush.xpose.msra.mxu0 0.0
  %196 = vmatpush.xpose.msra.mxu0 0.0
  %197 = vmatpush.xpose.msra.mxu0 0.0
  %198 = vmatpush.xpose.msra.mxu0 0.0
  %199 = vmatpush.xpose.msra.mxu0 0.0
  %200 = vmatpush.xpose.msra.mxu0 0.0
  %201 = vmatpush.xpose.msra.mxu0 0.0
  %202 = vmatpush.xpose.msra.mxu0 0.0
  %203 = vmatpush.xpose.msra.mxu0 0.0
  %204 = vmatpush.xpose.msra.mxu0 0.0
  %205 = vmatpush.xpose.msra.mxu0 0.0
  %206 = vmatpush.xpose.msra.mxu0 0.0
  %207 = vmatpush.xpose.msra.mxu0 %v193
  %208 = vmatpush.xpose.msra.mxu0 %v190
  %209 = vmatpush.xpose.msra.mxu0 %v187
  %210 = vmatpush.xpose.msra.mxu0 %v184
  %211 = vmatmul.f32.gmra.mxu0 %v154
  %v212 = vpop.f32.mrf.mxu0
  %v213 = vadd.f32 0.0, %v212
  %214 = vmatmul.f32.gmra.mxu0 %v157
  %v215 = vpop.f32.mrf.mxu0
  %v216 = vadd.f32 0.0, %v215
  %217 = vmatmul.f32.gmra.mxu0 %v160
  %v218 = vpop.f32.mrf.mxu0
  %v219 = vadd.f32 0.0, %v218
  %220 = vmatmul.f32.gmra.mxu0 %v163
  %v221 = vpop.f32.mrf.mxu0
  %v222 = vadd.f32 0.0, %v221
  %223 = vmatmul.f32.gmra.mxu0 %v166
  %v224 = vpop.f32.mrf.mxu0
  %v225 = vadd.f32 0.0, %v224
  %226 = vmatmul.f32.gmra.mxu0 %v169
  %v227 = vpop.f32.mrf.mxu0
  %v228 = vadd.f32 0.0, %v227
  %229 = vmatmul.f32.gmra.mxu0 %v172
  %v230 = vpop.f32.mrf.mxu0
  %v231 = vadd.f32 0.0, %v230
  %232 = vmatmul.f32.gmra.mxu0 %v175
  %v233 = vpop.f32.mrf.mxu0
  %v234 = vadd.f32 0.0, %v233
  %235 = vmatmul.f32.gmra.mxu0 %v178
  %v236 = vpop.f32.mrf.mxu0
  %v237 = vadd.f32 0.0, %v236
  %238 = vmatmul.f32.gmra.mxu0 %v181
  %v239 = vpop.f32.mrf.mxu0
  %v240 = vadd.f32 0.0, %v239
  %241 = vdwg.mxu0
  %v242 = vld [vmem:[%s4] sm:$0x1]
  %v244 = vperm.slane %v242, 0
  %v246 = vadd.f32 %v213, %v244
  %v247 = vsub.f32 %v34, %v246
  %v248 = vmul.f32 %v247, 8.0
  %v249 = vmul.f32 %v216, 2.0
  %v250 = vsub.f32 %v248, %v249
  %v251 = vmul.f32 %v247, %v250
  %v252 = vsel %vm101, %v251, 0.0
  %253 = vadd.xlane.f32.xlu0 %v252
  %v254 = vpop.xlane.xlu0 %253
  %v255 = vrot.slane %v254, 4
  %v256 = vadd.f32 %v254, %v255
  %v257 = vrot.slane %v256, 2
  %v258 = vadd.f32 %v256, %v257
  %v259 = vrot.slane %v258, 1
  %v260 = vadd.f32 %v258, %v259
  %s261 = vtos %v260
  %v262 = vmul.f32 %v219, %v219
  %v263 = vmul.f32 %v222, %v222
  %v264 = vmul.f32 %v225, %v225
  %v265 = vmul.f32 %v228, %v228
  %v266 = vmul.f32 %v231, %v231
  %v267 = vmul.f32 %v234, %v234
  %v268 = vmul.f32 %v237, %v237
  %v269 = vmul.f32 %v240, %v240
  %v270 = vsel %vm101, %v262, 0.0
  %v271 = vsel %vm101, %v263, 0.0
  %v272 = vadd.f32 %v270, %v271
  %v273 = vsel %vm101, %v264, 0.0
  %v274 = vadd.f32 %v272, %v273
  %v275 = vsel %vm101, %v265, 0.0
  %v276 = vadd.f32 %v274, %v275
  %v277 = vsel %vm101, %v266, 0.0
  %v278 = vadd.f32 %v276, %v277
  %v279 = vsel %vm101, %v267, 0.0
  %v280 = vadd.f32 %v278, %v279
  %v281 = vsel %vm101, %v268, 0.0
  %v282 = vadd.f32 %v280, %v281
  %v283 = vsel %vm101, %v269, 0.0
  %v284 = vadd.f32 %v282, %v283
  %285 = vadd.xlane.f32.xlu0 %v284
  %v286 = vpop.xlane.xlu0 %285
  %v287 = vrot.slane %v286, 4
  %v288 = vadd.f32 %v286, %v287
  %v289 = vrot.slane %v288, 2
  %v290 = vadd.f32 %v288, %v289
  %v291 = vrot.slane %v290, 1
  %v292 = vadd.f32 %v290, %v291
  %s293 = vtos %v292
  %s294 = sadd.f32 %s261, %s293
  %v295 = vlog2.pop %v78
  %v296 = vmul.f32 %v295, 0.6931472
  %v297 = vmul.f32 %v78, %v78
  %v299 = vperm.slane %v297, 0
  %vm301 = vcmask 1040384
  %v302 = vsel %vm301, %v296, %v299
  %vm303 = vcmask 123904
  %v304 = vsel %vm303, %v302, 0.0
  %305 = vadd.xlane.f32.xlu0 %v304
  %v306 = vpop.xlane.xlu0 %305
  %v307 = vsub.f32 0.0, %v306
  %v308 = vmul.f32 %v306, 0.5
  %v310 = vrot.slane %v308, 1
  %v312 = vadd.f32 %v307, %v310
  %v313 = vsub.f32 %v312, 8.0
  %v314 = vmul.f32 %v313, 8.0
  %v315 = vmul.f32 %v129, %v129
  %v316 = vsel %vm152, %v315, 0.0
  %317 = vadd.xlane.f32.xlu0 %v316
  %v318 = vpop.xlane.xlu0 %317
  %v319 = vrot.slane %v318, 4
  %v320 = vadd.f32 %v318, %v319
  %v321 = vrot.slane %v320, 2
  %v322 = vadd.f32 %v320, %v321
  %v323 = vrot.slane %v322, 1
  %v324 = vadd.f32 %v322, %v323
  %s325 = vtos %v324
  %s326 = smul.f32 %s325, 0.5
  %v327 = vstv %s326
  %v328 = vadd.f32 %v314, %v327
  %v329 = vadd.f32 %v80, 0.9189385
  %v330 = vmul.f32 %v329, 256.0
  %s331 = smul.f32 %s294, -0.0625
  %v332 = vstv %s331
  %v333 = vmul.f32 %v332, %v96
  %v334 = vsub.f32 %v333, %v330
  %v335 = vsub.f32 %v334, %v328
  %v336 = vmul.f32 %v80, 32.0
  %v337 = vsub.f32 -45.406033, %v336
  %v338 = vadd.f32 %v337, %v306
  %v339 = vmul.f32 %v338, 8.0
  %v340 = vlaneseq
  %v341 = vand.u32 %v340, 127
  %vm342 = vcmp.eq.s32.totalorder %v341, 0
  %vm343 = vcmp.eq.s32.totalorder %v341, 1
  %v345 = vperm.slane %v339, 0
  %346 = vset.pattern.permute.xlu0 0
  %347 = vperm.xlu0 %346, %v345
  %v348 = vpop.permute.xlu0 %347
  %v350 = vsel %vm343, %v348, 0.0
  %v352 = vperm.slane %v335, 0
  %353 = vset.pattern.permute.xlu0 0
  %354 = vperm.xlu0 %353, %v352
  %v355 = vpop.permute.xlu0 %354
  %v357 = vsel %vm342, %v355, %v350
  %358 = vst [vmem:[%s9] sm:$0xff] %v357
  // Predicated region
  $region38: #{linear_vae_forward.1} parent=0 // pred_check
    _
  $region39: #{linear_vae_forward.1} parent=0 // pred_check_branch
    %360 = sbr.rel (0) target = $region41
  $region40: #{linear_vae_forward.1} parent=0 // pred_region
    _
  $region41: #{linear_vae_forward.1} parent=0 // pred_fallthru
    _
  // Predicated region
  $region42: #{linear_vae_forward.1} parent=0 // pred_check
    _
  $region43: #{linear_vae_forward.1} parent=0 // pred_check_branch
    %362 = sbr.rel (0) target = $region45
  $region44: #{linear_vae_forward.1} parent=0 // pred_region
    _
  $region45: #{linear_vae_forward.1} parent=0 // pred_fallthru
    _

</llo_original>
